<compile_context>
chip_gen: v6e
topology: v6e:2x2x1
jax: 0.10.0
libtpu: 0.0.40
codegen_flags: <defaults>
</compile_context>

<pallas_src>
import functools
import math

import jax
import jax.numpy as jnp
from jax import lax
from jax.experimental import pallas as pl
from jax.experimental.pallas import tpu as pltpu

# ---- module hyper-parameters (deterministic, set in-script) ----
SIZE = 32          # vocab size (x.shape[1])
PADDING_IDX = 0
SMOOTHING = 0.1


def _cdiv(a, b):
    return -(-a // b)


def _round_up(a, b):
    return _cdiv(a, b) * b


def _xlogx(v):
    return v * math.log(v) if v > 0.0 else 0.0


def label_smoothing_kernel(x_ref, tgt_ref, out_ref, acc_ref, *, size,
                           padding_idx, confidence, smooth_fill, ent_per_elem):
    """Grid = (chunk [parallel], tile [arbitrary]); one step = (T, V) rows."""
    t = pl.program_id(1)

    @pl.when(t == 0)
    def _init():
        acc_ref[...] = jnp.zeros_like(acc_ref)
        out_ref[...] = jnp.zeros_like(out_ref)

    x = x_ref[...].astype(jnp.float32)            # (T, V) log-probs
    tgt = tgt_ref[...]                            # (T, 1) int32

    col = lax.broadcasted_iota(jnp.int32, (1, size), 1)            # (1, V)
    # base row of the smoothed dist: smooth_fill everywhere, 0 at padding col.
    base = jnp.where(col == padding_idx, jnp.float32(0.0),
                     jnp.float32(smooth_fill))                     # (1, V)
    w = jnp.where(col == tgt, jnp.float32(confidence), base)       # (T, V)
    # Per-element: td*x minus the (compile-time) row entropy spread over the row;
    # sum over a valid row gives  sum(td*x) - sum(td*log(td)).
    pw = w * x - jnp.float32(ent_per_elem)
    valid = tgt != padding_idx                                     # (T, 1)
    acc_ref[...] += jnp.where(valid, pw, jnp.float32(0.0))

    @pl.when(t == pl.num_programs(1) - 1)
    def _finalize():
        colsum = jnp.sum(acc_ref[...], axis=0, keepdims=True)      # (1, V)
        # partial KL for this chunk = sum(td*log(td) - td*x) = -sum(acc)
        out_ref[...] = (-colsum).reshape(1, 1, size)


def label_smoothing_loss(x, target, *, size=SIZE, padding_idx=PADDING_IDX,
                         smoothing=SMOOTHING, tile_rows=8192,
                         max_parallel_chunks=2):
    """x: (N, size) float log-probs, target: (N,) int. Returns scalar f32 loss."""
    assert x.ndim == 2 and x.shape[1] == size
    assert size > 2, "smoothing/(size-2) requires size > 2"
    n = x.shape[0]
    confidence = 1.0 - smoothing
    smooth_fill = smoothing / (size - 2)
    # sum_c td*log(td) for one non-padding row (compile-time constant).
    row_entropy = _xlogx(confidence) + (size - 2) * _xlogx(smooth_fill)

    target = target.astype(jnp.int32).reshape(n, 1)

    # Row-tile size: multiple of 8, no larger than (padded) N.
    tile_rows = _round_up(min(tile_rows, _round_up(n, 8)), 8)
    n_tiles = _cdiv(n, tile_rows)
    num_chunks = max(1, min(max_parallel_chunks, n_tiles))
    tiles_per_chunk = _cdiv(n_tiles, num_chunks)
    n_pad = num_chunks * tiles_per_chunk * tile_rows
    if n_pad != n:
        # Padding rows get target == padding_idx -> contribute exactly 0 loss.
        x = jnp.pad(x, ((0, n_pad - n), (0, 0)))
        target = jnp.pad(target, ((0, n_pad - n), (0, 0)),
                         constant_values=padding_idx)

    kernel = functools.partial(
        label_smoothing_kernel, size=size, padding_idx=padding_idx,
        confidence=confidence, smooth_fill=smooth_fill,
        ent_per_elem=row_entropy / size)

    def row_map(c, t):
        return (c * tiles_per_chunk + t, 0)

    partials = pl.pallas_call(
        kernel,
        out_shape=jax.ShapeDtypeStruct((num_chunks, 1, size), jnp.float32),
        grid_spec=pltpu.PrefetchScalarGridSpec(
            num_scalar_prefetch=0,
            grid=(num_chunks, tiles_per_chunk),
            in_specs=[
                pl.BlockSpec((tile_rows, size), row_map),
                pl.BlockSpec((tile_rows, 1), row_map),
            ],
            out_specs=pl.BlockSpec((1, 1, size), lambda c, t: (c, 0, 0)),
            scratch_shapes=[pltpu.VMEM((tile_rows, size), jnp.float32)],
        ),
        compiler_params=pltpu.CompilerParams(
            dimension_semantics=("parallel", "arbitrary"),
            vmem_limit_bytes=32 * 1024 * 1024,
        ),
    )(x, target)
    # Tiny final reduction over chunks / columns done by XLA in the wrapper.
    return jnp.sum(partials)


def _reference(x, target, *, size=SIZE, padding_idx=PADDING_IDX,
               smoothing=SMOOTHING):
    """Pure-JAX reference mirroring the PyTorch module."""
    n, v = x.shape
    confidence = 1.0 - smoothing
    fill = smoothing / (size - 2)
    td = jnp.full((n, v), fill, dtype=jnp.float32)
    td = td.at[jnp.arange(n), target].set(confidence)
    td = td.at[:, padding_idx].set(0.0)
    td = jnp.where((target == padding_idx)[:, None], 0.0, td)
    xlogy = jnp.where(td > 0.0, td * jnp.log(td), 0.0)
    return jnp.sum(xlogy - td * x)


if __name__ == "__main__":
    key = jax.random.PRNGKey(0)
    k1, k2, k3, k4 = jax.random.split(key, 4)

    # Case 1: small, single tile / single chunk (matches module's expected use).
    n1 = 16
    x1 = jax.nn.log_softmax(jax.random.normal(k1, (n1, SIZE), jnp.float32), axis=-1)
    t1 = jax.random.randint(k2, (n1,), 0, SIZE, dtype=jnp.int32)
    t1 = t1.at[3].set(PADDING_IDX).at[10].set(PADDING_IDX)  # exercise row-zeroing

    loss1 = jax.block_until_ready(label_smoothing_loss(x1, t1))
    ref1 = jax.block_until_ready(_reference(x1, t1))
    if not jnp.allclose(loss1, ref1, rtol=1e-4, atol=1e-4):
        raise AssertionError(f"case1 mismatch: pallas={loss1} ref={ref1}")

    # Case 2: N not a multiple of the tile -> exercises wrapper padding,
    # multi-tile accumulation and the 2-chunk "parallel" axis with partial sums.
    n2 = 520
    x2 = jax.nn.log_softmax(jax.random.normal(k3, (n2, SIZE), jnp.float32), axis=-1)
    t2 = jax.random.randint(k4, (n2,), 0, SIZE, dtype=jnp.int32)

    loss2 = jax.block_until_ready(label_smoothing_loss(x2, t2, tile_rows=128))
    ref2 = jax.block_until_ready(_reference(x2, t2))
    if not jnp.allclose(loss2, ref2, rtol=1e-4, atol=1e-4):
        raise AssertionError(f"case2 mismatch: pallas={loss2} ref={ref2}")

    print("KERNEL_OK")
</pallas_src>

<mosaic_0001>
module attributes {stable_mosaic.version = 11 : i64} {
  func.func @label_smoothing_kernel(%arg0: i32, %arg1: i32, %arg2: memref<16x32xf32, #tpu.memory_space<vmem>>, %arg3: memref<16x1xi32, #tpu.memory_space<vmem>>, %arg4: memref<1x1x32xf32, #tpu.memory_space<vmem>>, %arg5: memref<16x32xf32, #tpu.memory_space<vmem>>) attributes {dimension_semantics = [#tpu.dimension_semantics<parallel>, #tpu.dimension_semantics<arbitrary>], iteration_bounds = array<i64: 1, 1>, scalar_prefetch = 0 : i64, scratch_operands = 1 : i64, tpu.core_type = #tpu.core_type<tc>, window_params = [{transform_indices = @transform_0, window_bounds = array<i64: 16, 32>}, {transform_indices = @transform_1, window_bounds = array<i64: 16, 1>}, {transform_indices = @transform_2, window_bounds = array<i64: 1, 1, 32>}]} {
    %c0_i32 = arith.constant 0 : i32
    %0 = arith.cmpi eq, %arg1, %c0_i32 : i32
    %1 = arith.extui %0 : i1 to i32
    %c0_i32_0 = arith.constant 0 : i32
    %2 = arith.cmpi ne, %1, %c0_i32_0 : i32
    scf.if %2 {
      %cst_16 = arith.constant 0.000000e+00 : f32
      %33 = vector.broadcast %cst_16 : f32 to vector<16x32xf32>
      %c0_17 = arith.constant 0 : index
      %c0_18 = arith.constant 0 : index
      %34 = vector.load %arg5[%c0_17, %c0_18] : memref<16x32xf32, #tpu.memory_space<vmem>>, vector<16x32xf32>
      tpu.vector_store %arg5[%c0_17, %c0_18], %33 {strides = array<i32>} : memref<16x32xf32, #tpu.memory_space<vmem>>, vector<16x32xf32>,
      %cst_19 = arith.constant 0.000000e+00 : f32
      %35 = vector.broadcast %cst_19 : f32 to vector<1x1x32xf32>
      %c0_20 = arith.constant 0 : index
      %c0_21 = arith.constant 0 : index
      %c0_22 = arith.constant 0 : index
      %36 = vector.load %arg4[%c0_20, %c0_21, %c0_22] : memref<1x1x32xf32, #tpu.memory_space<vmem>>, vector<1x1x32xf32>
      tpu.vector_store %arg4[%c0_20, %c0_21, %c0_22], %35 {strides = array<i32>} : memref<1x1x32xf32, #tpu.memory_space<vmem>>, vector<1x1x32xf32>,
    } else {
    }
    %c0 = arith.constant 0 : index
    %c0_1 = arith.constant 0 : index
    %3 = vector.load %arg2[%c0, %c0_1] : memref<16x32xf32, #tpu.memory_space<vmem>>, vector<16x32xf32>
    %c0_2 = arith.constant 0 : index
    %c0_3 = arith.constant 0 : index
    %4 = vector.load %arg3[%c0_2, %c0_3] : memref<16x1xi32, #tpu.memory_space<vmem>>, vector<16x1xi32>
    %5 = tpu.iota {dimensions = array<i32: 1>} : vector<1x32xi32>
    %c0_i32_4 = arith.constant 0 : i32
    %6 = vector.broadcast %c0_i32_4 : i32 to vector<1x32xi32>
    %7 = arith.cmpi eq, %5, %6 : vector<1x32xi32>
    %cst = arith.constant 0.000000e+00 : f32
    %cst_5 = arith.constant 0.00333333341 : f32
    %8 = vector.broadcast %cst : f32 to vector<1x32xf32>
    %9 = vector.broadcast %cst_5 : f32 to vector<1x32xf32>
    %10 = arith.select %7, %8, %9 : vector<1x32xi1>, vector<1x32xf32>
    %11 = vector.broadcast %5 : vector<1x32xi32> to vector<16x32xi32>
    %12 = vector.broadcast %4 : vector<16x1xi32> to vector<16x32xi32>
    %13 = arith.cmpi eq, %11, %12 : vector<16x32xi32>
    %cst_6 = arith.constant 0.899999976 : f32
    %14 = vector.broadcast %cst_6 : f32 to vector<16x32xf32>
    %15 = vector.shape_cast %10 : vector<1x32xf32> to vector<1x32xf32>
    %16 = vector.broadcast %15 : vector<1x32xf32> to vector<16x32xf32>
    %17 = arith.select %13, %14, %16 : vector<16x32xi1>, vector<16x32xf32>
    %18 = arith.mulf %17, %3 : vector<16x32xf32>
    %cst_7 = arith.constant -0.0207875855 : f32
    %19 = vector.broadcast %cst_7 : f32 to vector<16x32xf32>
    %20 = arith.subf %18, %19 : vector<16x32xf32>
    %c0_i32_8 = arith.constant 0 : i32
    %21 = vector.broadcast %c0_i32_8 : i32 to vector<16x1xi32>
    %22 = arith.cmpi ne, %4, %21 : vector<16x1xi32>
    %c0_9 = arith.constant 0 : index
    %c0_10 = arith.constant 0 : index
    %23 = vector.load %arg5[%c0_9, %c0_10] : memref<16x32xf32, #tpu.memory_space<vmem>>, vector<16x32xf32>
    %cst_11 = arith.constant 0.000000e+00 : f32
    %24 = vector.shape_cast %22 : vector<16x1xi1> to vector<16x1xi1>
    %25 = vector.broadcast %24 : vector<16x1xi1> to vector<16x32xi1>
    %26 = vector.broadcast %cst_11 : f32 to vector<16x32xf32>
    %27 = arith.select %25, %20, %26 : vector<16x32xi1>, vector<16x32xf32>
    %28 = arith.addf %23, %27 : vector<16x32xf32>
    %c0_12 = arith.constant 0 : index
    %c0_13 = arith.constant 0 : index
    %29 = vector.load %arg5[%c0_12, %c0_13] : memref<16x32xf32, #tpu.memory_space<vmem>>, vector<16x32xf32>
    tpu.vector_store %arg5[%c0_12, %c0_13], %28 {strides = array<i32>} : memref<16x32xf32, #tpu.memory_space<vmem>>, vector<16x32xf32>,
    %c0_i32_14 = arith.constant 0 : i32
    %30 = arith.cmpi eq, %arg1, %c0_i32_14 : i32
    %31 = arith.extui %30 : i1 to i32
    %c0_i32_15 = arith.constant 0 : i32
    %32 = arith.cmpi ne, %31, %c0_i32_15 : i32
    scf.if %32 {
      %c0_16 = arith.constant 0 : index
      %c0_17 = arith.constant 0 : index
      %33 = vector.load %arg5[%c0_16, %c0_17] : memref<16x32xf32, #tpu.memory_space<vmem>>, vector<16x32xf32>
      %cst_18 = arith.constant dense<0.000000e+00> : vector<32xf32>
      %34 = vector.multi_reduction <add>, %33, %cst_18 [0] : vector<16x32xf32> to vector<32xf32>
      %35 = vector.shape_cast %34 : vector<32xf32> to vector<1x32xf32>
      %cst_19 = arith.constant 0.000000e+00 : f32
      %36 = vector.broadcast %cst_19 : f32 to vector<1x32xf32>
      %37 = arith.subf %36, %35 : vector<1x32xf32>
      %38 = vector.shape_cast %37 : vector<1x32xf32> to vector<1x1x32xf32>
      %c0_20 = arith.constant 0 : index
      %c0_21 = arith.constant 0 : index
      %c0_22 = arith.constant 0 : index
      %39 = vector.load %arg4[%c0_20, %c0_21, %c0_22] : memref<1x1x32xf32, #tpu.memory_space<vmem>>, vector<1x1x32xf32>
      tpu.vector_store %arg4[%c0_20, %c0_21, %c0_22], %38 {strides = array<i32>} : memref<1x1x32xf32, #tpu.memory_space<vmem>>, vector<1x1x32xf32>,
    } else {
    }
    return
  }
  func.func @transform_0(%arg0: i32, %arg1: i32) -> (i32, i32) {
    %c1_i32 = arith.constant 1 : i32
    %0 = arith.muli %arg0, %c1_i32 : i32
    %1 = arith.addi %0, %arg1 : i32
    %c0_i32 = arith.constant 0 : i32
    %c0_i32_0 = arith.constant 0 : i32
    return %1, %c0_i32 : i32, i32
  }
  func.func @transform_1(%arg0: i32, %arg1: i32) -> (i32, i32) {
    %c1_i32 = arith.constant 1 : i32
    %0 = arith.muli %arg0, %c1_i32 : i32
    %1 = arith.addi %0, %arg1 : i32
    %c0_i32 = arith.constant 0 : i32
    %c0_i32_0 = arith.constant 0 : i32
    return %1, %c0_i32 : i32, i32
  }
  func.func @transform_2(%arg0: i32, %arg1: i32) -> (i32, i32, i32) {
    %c0_i32 = arith.constant 0 : i32
    %c0_i32_0 = arith.constant 0 : i32
    %c0_i32_1 = arith.constant 0 : i32
    return %arg0, %c0_i32, %c0_i32_0 : i32, i32, i32
  }
}

</mosaic_0001>

<llo_original>
// kernel: tpu_custom_call.1
$region0: #{tpu_custom_call.1}
  #allocation0 [shape = 'u32[]', space=smem, size = 0x4, offset = 0x4, fixed_abs, tag = 'smem constant byte address 0x4 - core index']
  #allocation1 [shape = 'u32[144,128]{1,0:T(1,128)}', space=vmem, size = 0x12000, scoped, tag = 'internal scratch']
  #allocation2 [shape = 'f32[16,32]{1,0:T(8,128)}', space=vmem, size = 0x2000, scoped, tag = 'scratch operand']
  %s0 = inlined_call_operand.vmem [shape: f32[16,32], index: 0, kind: input, shape index: {}]
  %s1 = inlined_call_operand.vmem [shape: s32[16,1], index: 1, kind: input, shape index: {}]
  %s2 = inlined_call_operand.hbm [shape: f32[1,1,32], index: 2, kind: output, shape index: {}]
  %s3 = sld [smem:[#allocation0]]
  $region26: #{tpu_custom_call.1} parent=0
    _
  %s5 = ssub.s32 1, %s3
  %s6 = scalar_select 0, %s5, %s3
  $region1: #{tpu_custom_call.1} parent=0
    #allocation3 [shape = 'u8[512]{0}', space=vmem, size = 0x400, scoped, tag = 'output window, operand 0, single buffered']
    #allocation4 [shape = 's32[1]{0}', space=sflag, size = 0x4, scoped, tag = 'scoped memory for tpu_custom_call.1']
    %7 = vsyncpa [#allocation4], 0
    // Predicated region
    $region2: #{tpu_custom_call.1} parent=1 // pred_check
      _
    $region3: #{tpu_custom_call.1} parent=1 // pred_check_branch
      %9 = sbr.rel (0) target = $region5
    $region4: #{tpu_custom_call.1} parent=1 // pred_region
      %s10 = sadd.s32 0, 0
      %s11 = smul.u32 2, %s10
      %p12 = scmp.lt.s32.totalorder %s11, 1
      %s13 = scalar_select %p12, %s11, 1
      %s14 = smul.addr %s13, 8
      %s15 = scalar_lea.vmem %s0, %s14
      %s16 = sadd.s32 0, 0
      %s17 = smul.u32 2, %s16
    $region5: #{tpu_custom_call.1} parent=1 // pred_fallthru
      _
    // Predicated region
    $region6: #{tpu_custom_call.1} parent=1 // pred_check
      _
    $region7: #{tpu_custom_call.1} parent=1 // pred_check_branch
      %19 = sbr.rel (0) target = $region9
    $region8: #{tpu_custom_call.1} parent=1 // pred_region
      %s20 = sadd.s32 0, 0
      %s21 = smul.u32 2, %s20
      %p22 = scmp.lt.s32.totalorder %s21, 1
      %s23 = scalar_select %p22, %s21, 1
      %s24 = smul.addr %s23, 8
      %s25 = scalar_lea.vmem %s1, %s24
      %s26 = sadd.s32 0, 0
      %s27 = smul.u32 2, %s26
    $region9: #{tpu_custom_call.1} parent=1 // pred_fallthru
      _
    %s28 = sadd.s32 0, 0
    %s29 = smul.u32 2, %s28
    %p30 = scmp.lt.s32.totalorder %s29, 1
    %s31 = scalar_select %p30, %s29, 1
    %s32 = smul.addr %s31, 8
    %s33 = scalar_lea.vmem %s0, %s32
    %s34 = sadd.s32 0, 0
    %s35 = smul.u32 2, %s34
    %p36 = scmp.lt.s32.totalorder %s35, 1
    %s37 = scalar_select %p36, %s35, 1
    %s38 = smul.addr %s37, 8
    %s39 = scalar_lea.vmem %s1, %s38
    %s40 = sadd.s32 0, 0
    %s41 = smul.u32 2, %s40
    %p42 = scmp.lt.s32.totalorder %s41, 1
    %s43 = scalar_select %p42, %s41, 1
    %s44 = smul.addr %s43, 8
    %s45 = scalar_lea.vmem %s0, %s44
    %s46 = sadd.s32 0, 0
    %s47 = smul.u32 2, %s46
    %s48 = sadd.s32 0, 0
    %s49 = smul.u32 2, %s48
    %p50 = scmp.lt.s32.totalorder %s49, 1
    %s51 = scalar_select %p50, %s49, 1
    %s52 = smul.addr %s51, 8
    %s53 = scalar_lea.vmem %s1, %s52
    %s54 = sadd.s32 0, 0
    %s55 = smul.u32 2, %s54
    %p56 = scmp.eq.s32.totalorder 0, 0
    // Predicated region
    $region10: #{tpu_custom_call.1} parent=1 // pred_check
      %p57 = pneg %p56
    $region11: #{tpu_custom_call.1} parent=1 // pred_check_branch
      %59 = sbr.rel (%p57) target = $region13
    $region12: #{tpu_custom_call.1} parent=1 // pred_region
      %vm60 = vcmask 261120
      %61 = vst.msk [vmem:[#allocation2] sm:$0xff] %vm60, 0.0
      %62 = vst.msk [vmem:[#allocation2 + $0x8] sm:$0xff] %vm60, 0.0
      %vm63 = vcmask 253952
      %64 = vst.msk [vmem:[#allocation3] sm:$0x1] %vm63, 0.0
    $region13: #{tpu_custom_call.1} parent=1 // pred_fallthru
      _
    %v65 = vld [vmem:[%s45] sm:$0xff]
    %v66 = vld [vmem:[%s45 + $0x8] sm:$0xff]
    %v67 = vld [vmem:[%s53] sm:$0xff]
    %v68 = vld [vmem:[%s53 + $0x8] sm:$0xff]
    %v69 = vlaneseq
    %v70 = vand.u32 %v69, 127
    %vm71 = vcmp.eq.s32.totalorder %v70, 0
    %v72 = vsel %vm71, 0.0, 0.0033333334
    %73 = vset.pattern.permute.xlu0 0
    %74 = vperm.xlu0 %73, %v67
    %v75 = vpop.permute.xlu0 %74
    %76 = vset.pattern.permute.xlu0 0
    %77 = vperm.xlu0 %76, %v68
    %v78 = vpop.permute.xlu0 %77
    %vm79 = vcmp.eq.s32.totalorder %v70, %v75
    %vm80 = vcmp.eq.s32.totalorder %v70, %v78
    %v81 = vsel %vm79, 0.9, %v72
    %v82 = vsel %vm80, 0.9, %v72
    %v83 = vmul.f32 %v81, %v65
    %v84 = vmul.f32 %v82, %v66
    %v85 = vsub.f32 %v83, -0.020787586
    %v86 = vsub.f32 %v84, -0.020787586
    %vm87 = vcmp.ne.s32.totalorder %v67, 0
    %vm88 = vcmp.ne.s32.totalorder %v68, 0
    %v89 = vld [vmem:[#allocation2] sm:$0xff]
    %v90 = vld [vmem:[#allocation2 + $0x8] sm:$0xff]
    %v91 = vsel %vm87, 1, 0
    %v92 = vsel %vm88, 1, 0
    %93 = vset.pattern.permute.xlu0 0
    %94 = vperm.xlu0 %93, %v91
    %v95 = vpop.permute.xlu0 %94
    %96 = vset.pattern.permute.xlu0 0
    %97 = vperm.xlu0 %96, %v92
    %v98 = vpop.permute.xlu0 %97
    %vm99 = vcmp.eq.s32.totalorder %v95, 1
    %vm100 = vcmp.eq.s32.totalorder %v98, 1
    %v101 = vsel %vm99, %v85, 0.0
    %v102 = vsel %vm100, %v86, 0.0
    %v103 = vadd.f32 %v89, %v101
    %v104 = vadd.f32 %v90, %v102
    %vm105 = vcmask 261120
    %106 = vst.msk [vmem:[#allocation2] sm:$0xff] %vm105, %v103
    %107 = vst.msk [vmem:[#allocation2 + $0x8] sm:$0xff] %vm105, %v104
    // Predicated region
    $region14: #{tpu_custom_call.1} parent=1 // pred_check
      %p108 = pneg %p56
    $region15: #{tpu_custom_call.1} parent=1 // pred_check_branch
      %110 = sbr.rel (%p108) target = $region17
    $region16: #{tpu_custom_call.1} parent=1 // pred_region
      %v111 = vld [vmem:[#allocation2] sm:$0xff]
      %v112 = vld [vmem:[#allocation2 + $0x8] sm:$0xff]
      %v113 = vsel %vm105, %v111, 0.0
      %v114 = vsel %vm105, %v112, 0.0
      %v115 = vadd.f32 %v113, %v114
      %v116 = vrot.slane %v115, 4
      %v117 = vadd.f32 %v115, %v116
      %v118 = vrot.slane %v117, 2
      %v119 = vadd.f32 %v117, %v118
      %v120 = vrot.slane %v119, 1
      %v121 = vadd.f32 %v119, %v120
      %v122 = vsub.f32 0.0, %v121
      %vm123 = vcmask 253952
      %124 = vst.msk [vmem:[#allocation3] sm:$0x1] %vm123, %v122
    $region17: #{tpu_custom_call.1} parent=1 // pred_fallthru
      _
    // Predicated region
    $region18: #{tpu_custom_call.1} parent=1 // pred_check
      _
    $region19: #{tpu_custom_call.1} parent=1 // pred_check_branch
      %126 = sbr.rel (0) target = $region21
    $region20: #{tpu_custom_call.1} parent=1 // pred_region
      %s128 = ssub.s32 16, 16
      %129 = vsyncadd [#allocation4], %s128
      %s131 = sshll.u32 [#allocation3], 4
      %s132 = int_to_ptr.vmem [resolvable:$true] %s131
      %134 = dma.vmem_to_hbm [thread:$0]  %s132, 16, %s2, [#allocation4]
    $region21: #{tpu_custom_call.1} parent=1 // pred_fallthru
      _
    // Predicated region
    $region22: #{tpu_custom_call.1} parent=1 // pred_check
      _
    $region23: #{tpu_custom_call.1} parent=1 // pred_check_branch
      %136 = sbr.rel (0) target = $region25
    $region24: #{tpu_custom_call.1} parent=1 // pred_region
      %137 = dma.done [#allocation4], 16
    $region25: #{tpu_custom_call.1} parent=1 // pred_fallthru
      _
    %138 = vsyncpa [#allocation4], 1

</llo_original>
